<compile_context>
chip_gen: v5e
topology: v5e:2x2
jax: 0.10.0
libtpu: 0.0.40
codegen_flags: <defaults>
</compile_context>

<pallas_src>
import math
from functools import partial

import jax
import jax.numpy as jnp
from jax.experimental import pallas as pl
from jax.experimental.pallas import tpu as pltpu


# ---------------------------------------------------------------------------
# Sinusoidal table (identical to the PyTorch __init__)
# ---------------------------------------------------------------------------
def build_pe(d_model: int, max_len: int) -> jnp.ndarray:
    assert d_model % 2 == 0, "d_model must be even (matches the PyTorch module)"
    position = jnp.arange(0, max_len, dtype=jnp.float32)[:, None]            # (L, 1)
    div_term = jnp.exp(
        jnp.arange(0, d_model, 2, dtype=jnp.float32) * -(math.log(10000.0) / d_model)
    )                                                                         # (D/2,)
    sin = jnp.sin(position * div_term)                                        # (L, D/2)
    cos = jnp.cos(position * div_term)                                        # (L, D/2)
    pe = jnp.stack([sin, cos], axis=-1).reshape(max_len, d_model)             # interleave
    # PyTorch: pe.unsqueeze(0).transpose(0, 1) -> (max_len, 1, 1, d_model)
    return pe.reshape(max_len, 1, 1, d_model)


# ---------------------------------------------------------------------------
# Kernels
# ---------------------------------------------------------------------------
def _add_pe_3d_kernel(x_ref, pe_ref, o_ref):
    # x/o: (ts, B, D); pe: (ts, 1, D) — broadcast across B on the VPU.
    # TODO(synk): fuse adjacent embedding-scale / dropout here if the surrounding
    # model has them — free on the VPU/EUP in this HBM-bound pass.
    o_ref[...] = (x_ref[...] + pe_ref[...]).astype(o_ref.dtype)


def _add_pe_2d_kernel(x_ref, pe_ref, o_ref, *, n_batch: int, d_model: int):
    # x/o: (ts, B*D) lane-dense; pe: (ts, D) replicated across B via 128-aligned
    # static slices (this path is only taken when d_model % 128 == 0).
    pe = pe_ref[...]
    for b in range(n_batch):  # static unroll; B is small on this path
        sl = pl.ds(b * d_model, d_model)
        o_ref[:, sl] = (x_ref[:, sl] + pe).astype(o_ref.dtype)


# ---------------------------------------------------------------------------
# Tiling helpers
# ---------------------------------------------------------------------------
def _round_up(x: int, m: int) -> int:
    return -(-x // m) * m


def _sublane_multiple(dtype) -> int:
    # 8 for f32, 16 for bf16/f16, 32 for int8/fp8.
    return max(8, 32 // jnp.dtype(dtype).itemsize)


def _num_tensorcores() -> int:
    """Defensive query; defaults to 1 (never force a split on single-TC chips)."""
    try:
        info = pltpu.get_tpu_info()
    except Exception:
        return 1
    for name in ("num_cores", "core_count", "num_tensorcores", "tensorcores_per_chip"):
        v = getattr(info, name, None)
        if isinstance(v, int) and v >= 1:
            return v
    return 1


def _pick_tile_rows(S: int, bytes_per_row: int, *, row_align: int, num_cores: int,
                    tile_budget_bytes: int = 8 * 1024 * 1024) -> int:
    """Sequence rows per grid step.

    `bytes_per_row` already includes the 2x double-buffering factor and the
    sublane/lane padding of the trailing block dims.  `row_align` is 1 when ts
    is a major (non-sublane) dim (3-D layout) and 8 when ts maps to sublanes
    (2-D layout).
    """
    ts = max(1, tile_budget_bytes // max(1, bytes_per_row))
    if ts >= S:
        # Everything fits in one tile.  Only force a split on multi-TC chips,
        # and then leave >= 2 steps per core with tiles of >= ~1 MiB each.
        if (num_cores > 1
                and S >= 2 * num_cores * row_align
                and S * bytes_per_row >= 2 * num_cores * (1 << 20)):
            ts = _round_up(pl.cdiv(S, 2 * num_cores), row_align)
            return max(1, min(ts, S))
        return S
    ts = max(row_align, (ts // row_align) * row_align)
    # Prefer a ts that divides S evenly (no ragged, masked last block), but do
    # not shrink the tile by more than 2x to get it.
    for cand in range(ts, max(row_align, ts // 2) - 1, -row_align):
        if S % cand == 0:
            ts = cand
            break
    return max(1, min(ts, S))


# ---------------------------------------------------------------------------
# Forward wrapper
# ---------------------------------------------------------------------------
def positional_encoding_forward(x: jnp.ndarray, pe: jnp.ndarray) -> jnp.ndarray:
    """x: (S, B, 1, D), pe: (max_len, 1, 1, D).  Returns x + pe[:S] in x.dtype."""
    S, B, one, D = x.shape
    assert one == 1
    max_len = pe.shape[0]
    assert S <= max_len, f"sequence length {S} exceeds max_len {max_len}"
    assert pe.shape[-1] == D

    itemsize = jnp.dtype(x.dtype).itemsize
    sub = _sublane_multiple(x.dtype)
    lane = 128
    ncores = _num_tensorcores()
    # Above the 16/32 MiB scoped defaults, safely below v7x's 64 MiB physical.
    vmem_limit = 48 * 1024 * 1024

    # Cast pe once in HBM: halves pe traffic for bf16 and keeps the kernel a
    # pure same-dtype add (no f32 result stored into a narrower out ref).
    pe_rows = pe[:S].reshape(S, D).astype(x.dtype)

    compiler_params = pltpu.CompilerParams(
        dimension_semantics=("parallel",),
        vmem_limit_bytes=vmem_limit,
    )

    use_lane_dense_2d = (B % sub != 0) and (D % lane == 0)

    if use_lane_dense_2d:
        # Sublane-ragged B but lane-aligned D: present x/out as (S, B*D) so the
        # store path is unmasked vst; pe stays a D-wide stream (1/B of x traffic).
        x_in = x.reshape(S, B * D)
        row_x = _round_up(B * D, lane) * itemsize            # per-row, padded
        row_pe = _round_up(D, lane) * itemsize
        bytes_per_row = 2 * (2 * row_x + row_pe)             # dbl-buffered x-in/out + pe-in
        ts = _pick_tile_rows(S, bytes_per_row, row_align=8, num_cores=ncores)
        grid = (pl.cdiv(S, ts),)
        out = pl.pallas_call(
            partial(_add_pe_2d_kernel, n_batch=B, d_model=D),
            out_shape=jax.ShapeDtypeStruct((S, B * D), x.dtype),
            grid_spec=pltpu.PrefetchScalarGridSpec(
                num_scalar_prefetch=0,
                grid=grid,
                in_specs=[
                    pl.BlockSpec((ts, B * D), lambda i: (i, 0)),
                    pl.BlockSpec((ts, D), lambda i: (i, 0)),
                ],
                out_specs=pl.BlockSpec((ts, B * D), lambda i: (i, 0)),
            ),
            compiler_params=compiler_params,
        )(x_in, pe_rows)
    else:
        # Dense (B % sub == 0) or fully-ragged fallback: (ts, B, D) tiles with
        # pe (ts, 1, D) broadcast over B in-register.
        x_in = x.reshape(S, B, D)
        pe_in = pe_rows.reshape(S, 1, D)
        row_x = _round_up(B, sub) * _round_up(D, lane) * itemsize   # padded (B, D) tile
        row_pe = sub * _round_up(D, lane) * itemsize
        bytes_per_row = 2 * (2 * row_x + row_pe)
        ts = _pick_tile_rows(S, bytes_per_row, row_align=1, num_cores=ncores)
        grid = (pl.cdiv(S, ts),)
        out = pl.pallas_call(
            _add_pe_3d_kernel,
            out_shape=jax.ShapeDtypeStruct((S, B, D), x.dtype),
            grid_spec=pltpu.PrefetchScalarGridSpec(
                num_scalar_prefetch=0,
                grid=grid,
                in_specs=[
                    pl.BlockSpec((ts, B, D), lambda i: (i, 0, 0)),
                    pl.BlockSpec((ts, 1, D), lambda i: (i, 0, 0)),
                ],
                out_specs=pl.BlockSpec((ts, B, D), lambda i: (i, 0, 0)),
            ),
            compiler_params=compiler_params,
        )(x_in, pe_in)

    # Note: input_output_aliases={0: 0} would halve the HBM footprint, but is
    # intentionally skipped here so the eager demo's `x` is never clobbered.
    return out.reshape(S, B, 1, D)


if __name__ == "__main__":
    key = jax.random.PRNGKey(0)

    # Exercise both layouts: (S, B, d_model, max_len)
    cases = [
        (8, 2, 32, 16),    # small B, D % 128 != 0  -> 3-D broadcast fallback path
        (8, 2, 128, 16),   # small B, lane-aligned D -> lane-dense 2-D path
        (16, 8, 128, 32),  # sublane-dense B         -> 3-D dense path
    ]

    for idx, (S, B, d_model, max_len) in enumerate(cases):
        k = jax.random.fold_in(key, idx)
        x = jax.random.normal(k, (S, B, 1, d_model), dtype=jnp.float32)
        pe = build_pe(d_model, max_len)

        out = jax.block_until_ready(positional_encoding_forward(x, pe))

        # Reference (pure JAX, same broadcasting as the PyTorch forward)
        ref = x + pe[:S]
        assert out.shape == ref.shape == (S, B, 1, d_model)
        assert jnp.allclose(out, ref, atol=1e-6), f"mismatch vs reference (case {idx})"

    print("KERNEL_OK")
</pallas_src>

<mosaic_0001>
module attributes {stable_mosaic.version = 11 : i64} {
  func.func @_add_pe_3d_kernel(%arg0: i32, %arg1: memref<8x2x32xf32, #tpu.memory_space<vmem>>, %arg2: memref<8x1x32xf32, #tpu.memory_space<vmem>>, %arg3: memref<8x2x32xf32, #tpu.memory_space<vmem>>) attributes {dimension_semantics = [#tpu.dimension_semantics<parallel>], iteration_bounds = array<i64: 1>, scalar_prefetch = 0 : i64, scratch_operands = 0 : i64, tpu.core_type = #tpu.core_type<tc>, window_params = [{transform_indices = @transform_0, window_bounds = array<i64: 8, 2, 32>}, {transform_indices = @transform_1, window_bounds = array<i64: 8, 1, 32>}, {transform_indices = @transform_2, window_bounds = array<i64: 8, 2, 32>}]} {
    %c0 = arith.constant 0 : index
    %c0_0 = arith.constant 0 : index
    %c0_1 = arith.constant 0 : index
    %0 = vector.load %arg1[%c0, %c0_0, %c0_1] : memref<8x2x32xf32, #tpu.memory_space<vmem>>, vector<8x2x32xf32>
    %c0_2 = arith.constant 0 : index
    %c0_3 = arith.constant 0 : index
    %c0_4 = arith.constant 0 : index
    %1 = vector.load %arg2[%c0_2, %c0_3, %c0_4] : memref<8x1x32xf32, #tpu.memory_space<vmem>>, vector<8x1x32xf32>
    %2 = vector.broadcast %1 : vector<8x1x32xf32> to vector<8x2x32xf32>
    %3 = arith.addf %0, %2 : vector<8x2x32xf32>
    %c0_5 = arith.constant 0 : index
    %c0_6 = arith.constant 0 : index
    %c0_7 = arith.constant 0 : index
    %4 = vector.load %arg3[%c0_5, %c0_6, %c0_7] : memref<8x2x32xf32, #tpu.memory_space<vmem>>, vector<8x2x32xf32>
    tpu.vector_store %arg3[%c0_5, %c0_6, %c0_7], %3 {strides = array<i32>} : memref<8x2x32xf32, #tpu.memory_space<vmem>>, vector<8x2x32xf32>,
    return
  }
  func.func @transform_0(%arg0: i32) -> (i32, i32, i32) {
    %c0_i32 = arith.constant 0 : i32
    %c0_i32_0 = arith.constant 0 : i32
    %c0_i32_1 = arith.constant 0 : i32
    return %arg0, %c0_i32, %c0_i32_0 : i32, i32, i32
  }
  func.func @transform_1(%arg0: i32) -> (i32, i32, i32) {
    %c0_i32 = arith.constant 0 : i32
    %c0_i32_0 = arith.constant 0 : i32
    %c0_i32_1 = arith.constant 0 : i32
    return %arg0, %c0_i32, %c0_i32_0 : i32, i32, i32
  }
  func.func @transform_2(%arg0: i32) -> (i32, i32, i32) {
    %c0_i32 = arith.constant 0 : i32
    %c0_i32_0 = arith.constant 0 : i32
    %c0_i32_1 = arith.constant 0 : i32
    return %arg0, %c0_i32, %c0_i32_0 : i32, i32, i32
  }
}

</mosaic_0001>

<llo_original>
// kernel: tpu_custom_call.1
$region0: #{tpu_custom_call.1}
  #allocation0 [shape = 'u32[]', space=smem, size = 0x4, offset = 0x4, fixed_abs, tag = 'smem constant byte address 0x4 - core index']
  #allocation1 [shape = 'u32[72,128]{1,0:T(1,128)}', space=vmem, size = 0x9000, scoped, tag = 'internal scratch']
  %s0 = inlined_call_operand.hbm [shape: f32[8,2,32], index: 0, kind: input, shape index: {}]
  %s1 = inlined_call_operand.hbm [shape: f32[8,1,32], index: 1, kind: input, shape index: {}]
  %s2 = inlined_call_operand.hbm [shape: f32[8,2,32], index: 2, kind: output, shape index: {}]
  %s3 = sld [smem:[#allocation0]]
  $region26: #{tpu_custom_call.1} parent=0
    _
  %s5 = ssub.s32 1, %s3
  %s6 = scalar_select 0, %s5, %s3
  $region1: #{tpu_custom_call.1} parent=0
    #allocation2 [shape = 'u8[8192]{0}', space=vmem, size = 0x2000, scoped, tag = 'input window, operand 0, single buffered']
    #allocation3 [shape = 's32[1]{0}', space=sflag, size = 0x4, scoped, tag = 'scoped memory for tpu_custom_call.1']
    #allocation4 [shape = 's32[1]{0}', space=sflag, size = 0x4, scoped, tag = 'scoped memory for tpu_custom_call.1']
    #allocation5 [shape = 'u8[4096]{0}', space=vmem, size = 0x1000, scoped, tag = 'input window, operand 1, single buffered']
    #allocation6 [shape = 's32[1]{0}', space=sflag, size = 0x4, scoped, tag = 'scoped memory for tpu_custom_call.1']
    #allocation7 [shape = 'u8[8192]{0}', space=vmem, size = 0x2000, scoped, tag = 'output window, operand 0, single buffered']
    %7 = vsyncpa [#allocation3], 0
    %8 = vsyncpa [#allocation6], 0
    %9 = vsyncpa [#allocation4], 0
    // Predicated region
    $region2: #{tpu_custom_call.1} parent=1 // pred_check
      _
    $region3: #{tpu_custom_call.1} parent=1 // pred_check_branch
      %11 = sbr.rel (0) target = $region5
    $region4: #{tpu_custom_call.1} parent=1 // pred_region
      %13 = vsyncadd [#allocation3], 0
      %s14 = sshll.u32 %s0, 4
      %s15 = int_to_ptr.hbm [resolvable:$true] %s14
      %s16 = sshll.u32 [#allocation2], 4
      %s17 = int_to_ptr.vmem [resolvable:$true] %s16
      %22 = dma.hbm_to_vmem [thread:$0]  %s15, 256, %s17, [#allocation3], 32, 32, 2
    $region5: #{tpu_custom_call.1} parent=1 // pred_fallthru
      _
    // Predicated region
    $region6: #{tpu_custom_call.1} parent=1 // pred_check
      _
    $region7: #{tpu_custom_call.1} parent=1 // pred_check_branch
      %24 = sbr.rel (0) target = $region9
    $region8: #{tpu_custom_call.1} parent=1 // pred_region
      %26 = vsyncadd [#allocation6], 0
      %s27 = sshll.u32 %s1, 4
      %s28 = int_to_ptr.hbm [resolvable:$true] %s27
      %s29 = sshll.u32 [#allocation5], 4
      %s30 = int_to_ptr.vmem [resolvable:$true] %s29
      %35 = dma.hbm_to_vmem [thread:$0]  %s28, 128, %s30, [#allocation6], 16, 16, 1
    $region9: #{tpu_custom_call.1} parent=1 // pred_fallthru
      _
    // Predicated region
    $region10: #{tpu_custom_call.1} parent=1 // pred_check
      _
    $region11: #{tpu_custom_call.1} parent=1 // pred_check_branch
      %37 = sbr.rel (0) target = $region13
    $region12: #{tpu_custom_call.1} parent=1 // pred_region
      %39 = dma.done [#allocation3], 256
    $region13: #{tpu_custom_call.1} parent=1 // pred_fallthru
      _
    // Predicated region
    $region14: #{tpu_custom_call.1} parent=1 // pred_check
      _
    $region15: #{tpu_custom_call.1} parent=1 // pred_check_branch
      %41 = sbr.rel (0) target = $region17
    $region16: #{tpu_custom_call.1} parent=1 // pred_region
      %43 = dma.done [#allocation6], 128
    $region17: #{tpu_custom_call.1} parent=1 // pred_fallthru
      _
    %v44 = vld [vmem:[#allocation2] sm:$0x3]
    %v45 = vld [vmem:[#allocation2 + $0x2] sm:$0x3]
    %v46 = vld [vmem:[#allocation2 + $0x4] sm:$0x3]
    %v47 = vld [vmem:[#allocation2 + $0x6] sm:$0x3]
    %v48 = vld [vmem:[#allocation2 + $0x8] sm:$0x3]
    %v49 = vld [vmem:[#allocation2 + $0xa] sm:$0x3]
    %v50 = vld [vmem:[#allocation2 + $0xc] sm:$0x3]
    %v51 = vld [vmem:[#allocation2 + $0xe] sm:$0x3]
    %v52 = vld [vmem:[#allocation5] sm:$0x1]
    %v53 = vld [vmem:[#allocation5 + $0x1] sm:$0x1]
    %v54 = vld [vmem:[#allocation5 + $0x2] sm:$0x1]
    %v55 = vld [vmem:[#allocation5 + $0x3] sm:$0x1]
    %v56 = vld [vmem:[#allocation5 + $0x4] sm:$0x1]
    %v57 = vld [vmem:[#allocation5 + $0x5] sm:$0x1]
    %v58 = vld [vmem:[#allocation5 + $0x6] sm:$0x1]
    %v59 = vld [vmem:[#allocation5 + $0x7] sm:$0x1]
    %v68 = vperm.slane %v52, 0
    %v69 = vperm.slane %v53, 0
    %v70 = vperm.slane %v54, 0
    %v71 = vperm.slane %v55, 0
    %v72 = vperm.slane %v56, 0
    %v73 = vperm.slane %v57, 0
    %v74 = vperm.slane %v58, 0
    %v75 = vperm.slane %v59, 0
    %v84 = vadd.f32 %v44, %v68
    %v85 = vadd.f32 %v45, %v69
    %v86 = vadd.f32 %v46, %v70
    %v87 = vadd.f32 %v47, %v71
    %v88 = vadd.f32 %v48, %v72
    %v89 = vadd.f32 %v49, %v73
    %v90 = vadd.f32 %v50, %v74
    %v91 = vadd.f32 %v51, %v75
    %vm92 = vcmask 254976
    %93 = vst.msk [vmem:[#allocation7] sm:$0x3] %vm92, %v84
    %94 = vst.msk [vmem:[#allocation7 + $0x2] sm:$0x3] %vm92, %v85
    %95 = vst.msk [vmem:[#allocation7 + $0x4] sm:$0x3] %vm92, %v86
    %96 = vst.msk [vmem:[#allocation7 + $0x6] sm:$0x3] %vm92, %v87
    %97 = vst.msk [vmem:[#allocation7 + $0x8] sm:$0x3] %vm92, %v88
    %98 = vst.msk [vmem:[#allocation7 + $0xa] sm:$0x3] %vm92, %v89
    %99 = vst.msk [vmem:[#allocation7 + $0xc] sm:$0x3] %vm92, %v90
    %100 = vst.msk [vmem:[#allocation7 + $0xe] sm:$0x3] %vm92, %v91
    // Predicated region
    $region18: #{tpu_custom_call.1} parent=1 // pred_check
      _
    $region19: #{tpu_custom_call.1} parent=1 // pred_check_branch
      %102 = sbr.rel (0) target = $region21
    $region20: #{tpu_custom_call.1} parent=1 // pred_region
      %104 = vsyncadd [#allocation4], 0
      %s105 = sshll.u32 [#allocation7], 4
      %s106 = int_to_ptr.vmem [resolvable:$true] %s105
      %s107 = sshll.u32 %s2, 4
      %s108 = int_to_ptr.hbm [resolvable:$true] %s107
      %113 = dma.vmem_to_hbm [thread:$0]  %s106, 256, %s108, [#allocation4], 32, 32, 2
    $region21: #{tpu_custom_call.1} parent=1 // pred_fallthru
      _
    // Predicated region
    $region22: #{tpu_custom_call.1} parent=1 // pred_check
      _
    $region23: #{tpu_custom_call.1} parent=1 // pred_check_branch
      %115 = sbr.rel (0) target = $region25
    $region24: #{tpu_custom_call.1} parent=1 // pred_region
      %117 = dma.done [#allocation4], 256
    $region25: #{tpu_custom_call.1} parent=1 // pred_fallthru
      _
    %118 = vsyncpa [#allocation3], 1
    %119 = vsyncpa [#allocation6], 1
    %120 = vsyncpa [#allocation4], 1

</llo_original>
